<compile_context>
chip_gen: v7x
topology: tpu7x:2x2x1
jax: 0.10.0
libtpu: 0.0.40
codegen_flags: <defaults>
</compile_context>

<pallas_src>
import jax
import jax.numpy as jnp
from jax.experimental import pallas as pl
from jax.experimental.pallas import tpu as pltpu


def _phase_gate_kernel(xr_ref, xi_ref, c_ref, s_ref, or_ref, oi_ref):
    c = c_ref[...]           # (1, D)  broadcast over rows
    s = s_ref[...]           # (1, D)
    xr = xr_ref[...]         # (TM, D)
    xi = xi_ref[...]         # (TM, D)
    or_ref[...] = xr * c - xi * s
    oi_ref[...] = xr * s + xi * c


def _round_up(n: int, m: int) -> int:
    return -(-n // m) * m


def _choose_tile_rows(M: int, D: int, target_tile_bytes: int = 2 * 1024 * 1024) -> int:
    """Pick a row-tile so each streamed buffer is ~target_tile_bytes of f32."""
    rows = max(8, (target_tile_bytes // (D * 4)) // 8 * 8)
    # Keep at least 2 grid steps when the problem allows it (v7x megacore).
    rows = min(rows, max(8, _round_up(pl.cdiv(M, 2), 8)))
    # Never exceed the (sublane-rounded) number of rows.
    rows = min(rows, _round_up(M, 8))
    return rows


def quantum_phase_gate_planar(x_re, x_im, cos_theta, sin_theta, *, tile_rows=None):
    """Planar fast path: f32 re/im in -> f32 re/im out (same shapes as inputs)."""
    orig_shape = x_re.shape
    D = orig_shape[-1]

    xr = x_re.astype(jnp.float32).reshape(-1, D)
    xi = x_im.astype(jnp.float32).reshape(-1, D)
    M = xr.shape[0]

    c = cos_theta.astype(jnp.float32).reshape(1, D)
    s = sin_theta.astype(jnp.float32).reshape(1, D)

    if tile_rows is None:
        tm = _choose_tile_rows(M, D)
    else:
        tm = min(_round_up(max(8, tile_rows), 8), _round_up(M, 8))

    grid = (pl.cdiv(M, tm),)
    row_spec = pl.BlockSpec((tm, D), lambda i: (i, 0))
    vec_spec = pl.BlockSpec((1, D), lambda i: (0, 0))

    out_re, out_im = pl.pallas_call(
        _phase_gate_kernel,
        out_shape=(
            jax.ShapeDtypeStruct((M, D), jnp.float32),
            jax.ShapeDtypeStruct((M, D), jnp.float32),
        ),
        grid=grid,
        in_specs=[row_spec, row_spec, vec_spec, vec_spec],
        out_specs=(row_spec, row_spec),
        compiler_params=pltpu.CompilerParams(
            dimension_semantics=("parallel",),
            vmem_limit_bytes=32 * 1024 * 1024,
        ),
    )(xr, xi, c, s)

    return out_re.reshape(orig_shape), out_im.reshape(orig_shape)


def quantum_phase_gate(x, theta, *, tile_rows=None):
    """Module-faithful wrapper: complex64 x (..., D), f32 theta (D,) -> complex64.

    Note: the real/imag split + complex recombine are extra HBM passes done by
    XLA; perf-critical callers should use quantum_phase_gate_planar directly.
    """
    orig_shape = x.shape
    D = orig_shape[-1]

    cos_t = jnp.cos(theta).astype(jnp.float32)
    sin_t = jnp.sin(theta).astype(jnp.float32)

    xr = jnp.real(x).astype(jnp.float32)
    xi = jnp.imag(x).astype(jnp.float32)

    out_re, out_im = quantum_phase_gate_planar(xr, xi, cos_t, sin_t, tile_rows=tile_rows)
    return jax.lax.complex(out_re, out_im).reshape(orig_shape)


if __name__ == "__main__":
    # Small shapes consistent with the module: (batch, seq, embed_dim)
    batch, seq, embed_dim = 2, 8, 128

    key = jax.random.PRNGKey(0)
    k_re, k_im, k_th = jax.random.split(key, 3)

    x_re = jax.random.normal(k_re, (batch, seq, embed_dim), dtype=jnp.float32)
    x_im = jax.random.normal(k_im, (batch, seq, embed_dim), dtype=jnp.float32)
    # Module init is theta = zeros(embed_dim) (identity); use a nonzero theta
    # so the phase rotation is actually exercised.
    theta = 0.1 * jax.random.normal(k_th, (embed_dim,), dtype=jnp.float32)

    # 1) Planar fast path (no complex dtype anywhere on the hot path).
    o_re, o_im = quantum_phase_gate_planar(x_re, x_im, jnp.cos(theta), jnp.sin(theta))
    jax.block_until_ready((o_re, o_im))

    # 2) Complex convenience wrapper (module-faithful semantics).
    x = jax.lax.complex(x_re, x_im)               # complex64 input
    out = quantum_phase_gate(x, theta)
    out = jax.block_until_ready(out)

    # Pure-JAX reference check
    ref = x * jnp.exp(1j * theta.astype(jnp.complex64))
    assert out.shape == x.shape and out.dtype == jnp.complex64
    assert jnp.allclose(out, ref, atol=1e-5, rtol=1e-5)
    assert jnp.allclose(o_re, jnp.real(ref), atol=1e-5, rtol=1e-5)
    assert jnp.allclose(o_im, jnp.imag(ref), atol=1e-5, rtol=1e-5)

    print("KERNEL_OK")
</pallas_src>

<mosaic_0001>
module attributes {stable_mosaic.version = 11 : i64} {
  func.func @_phase_gate_kernel(%arg0: i32, %arg1: memref<8x128xf32, #tpu.memory_space<vmem>>, %arg2: memref<8x128xf32, #tpu.memory_space<vmem>>, %arg3: memref<1x128xf32, #tpu.memory_space<vmem>>, %arg4: memref<1x128xf32, #tpu.memory_space<vmem>>, %arg5: memref<8x128xf32, #tpu.memory_space<vmem>>, %arg6: memref<8x128xf32, #tpu.memory_space<vmem>>) attributes {dimension_semantics = [#tpu.dimension_semantics<parallel>], iteration_bounds = array<i64: 2>, scalar_prefetch = 0 : i64, scratch_operands = 0 : i64, tpu.core_type = #tpu.core_type<tc>, window_params = [{transform_indices = @transform_0, window_bounds = array<i64: 8, 128>}, {transform_indices = @transform_1, window_bounds = array<i64: 8, 128>}, {pipeline_mode = #tpu.pipeline_mode<synchronous>, transform_indices = @transform_2, window_bounds = array<i64: 1, 128>}, {pipeline_mode = #tpu.pipeline_mode<synchronous>, transform_indices = @transform_3, window_bounds = array<i64: 1, 128>}, {transform_indices = @transform_4, window_bounds = array<i64: 8, 128>}, {transform_indices = @transform_5, window_bounds = array<i64: 8, 128>}]} {
    %c0 = arith.constant 0 : index
    %c0_0 = arith.constant 0 : index
    %0 = vector.load %arg3[%c0, %c0_0] : memref<1x128xf32, #tpu.memory_space<vmem>>, vector<1x128xf32>
    %c0_1 = arith.constant 0 : index
    %c0_2 = arith.constant 0 : index
    %1 = vector.load %arg4[%c0_1, %c0_2] : memref<1x128xf32, #tpu.memory_space<vmem>>, vector<1x128xf32>
    %c0_3 = arith.constant 0 : index
    %c0_4 = arith.constant 0 : index
    %2 = vector.load %arg1[%c0_3, %c0_4] : memref<8x128xf32, #tpu.memory_space<vmem>>, vector<8x128xf32>
    %c0_5 = arith.constant 0 : index
    %c0_6 = arith.constant 0 : index
    %3 = vector.load %arg2[%c0_5, %c0_6] : memref<8x128xf32, #tpu.memory_space<vmem>>, vector<8x128xf32>
    %4 = vector.broadcast %0 : vector<1x128xf32> to vector<8x128xf32>
    %5 = arith.mulf %2, %4 : vector<8x128xf32>
    %6 = vector.broadcast %1 : vector<1x128xf32> to vector<8x128xf32>
    %7 = arith.mulf %3, %6 : vector<8x128xf32>
    %8 = arith.subf %5, %7 : vector<8x128xf32>
    %c0_7 = arith.constant 0 : index
    %c0_8 = arith.constant 0 : index
    %9 = vector.load %arg5[%c0_7, %c0_8] : memref<8x128xf32, #tpu.memory_space<vmem>>, vector<8x128xf32>
    tpu.vector_store %arg5[%c0_7, %c0_8], %8 {strides = array<i32>} : memref<8x128xf32, #tpu.memory_space<vmem>>, vector<8x128xf32>,
    %10 = vector.broadcast %1 : vector<1x128xf32> to vector<8x128xf32>
    %11 = arith.mulf %2, %10 : vector<8x128xf32>
    %12 = vector.broadcast %0 : vector<1x128xf32> to vector<8x128xf32>
    %13 = arith.mulf %3, %12 : vector<8x128xf32>
    %14 = arith.addf %11, %13 : vector<8x128xf32>
    %c0_9 = arith.constant 0 : index
    %c0_10 = arith.constant 0 : index
    %15 = vector.load %arg6[%c0_9, %c0_10] : memref<8x128xf32, #tpu.memory_space<vmem>>, vector<8x128xf32>
    tpu.vector_store %arg6[%c0_9, %c0_10], %14 {strides = array<i32>} : memref<8x128xf32, #tpu.memory_space<vmem>>, vector<8x128xf32>,
    return
  }
  func.func @transform_0(%arg0: i32) -> (i32, i32) {
    %c0_i32 = arith.constant 0 : i32
    %c0_i32_0 = arith.constant 0 : i32
    return %arg0, %c0_i32 : i32, i32
  }
  func.func @transform_1(%arg0: i32) -> (i32, i32) {
    %c0_i32 = arith.constant 0 : i32
    %c0_i32_0 = arith.constant 0 : i32
    return %arg0, %c0_i32 : i32, i32
  }
  func.func @transform_2(%arg0: i32) -> (i32, i32) {
    %c0_i32 = arith.constant 0 : i32
    %c0_i32_0 = arith.constant 0 : i32
    %c0_i32_1 = arith.constant 0 : i32
    return %c0_i32, %c0_i32_0 : i32, i32
  }
  func.func @transform_3(%arg0: i32) -> (i32, i32) {
    %c0_i32 = arith.constant 0 : i32
    %c0_i32_0 = arith.constant 0 : i32
    %c0_i32_1 = arith.constant 0 : i32
    return %c0_i32, %c0_i32_0 : i32, i32
  }
  func.func @transform_4(%arg0: i32) -> (i32, i32) {
    %c0_i32 = arith.constant 0 : i32
    %c0_i32_0 = arith.constant 0 : i32
    return %arg0, %c0_i32 : i32, i32
  }
  func.func @transform_5(%arg0: i32) -> (i32, i32) {
    %c0_i32 = arith.constant 0 : i32
    %c0_i32_0 = arith.constant 0 : i32
    return %arg0, %c0_i32 : i32, i32
  }
}

</mosaic_0001>

<llo_original>
// kernel: tpu_custom_call.1
$region0: #{tpu_custom_call.1}
  #allocation0 [shape = 'u32[]', space=smem, size = 0x4, offset = 0x4, fixed_abs, tag = 'smem constant byte address 0x4 - core index']
  #allocation1 [shape = 'u32[144,128]{1,0:T(1,128)}', space=vmem, size = 0x12000, scoped, tag = 'internal scratch']
  %s0 = inlined_call_operand.hbm [shape: f32[16,128], index: 0, kind: input, shape index: {}]
  %s1 = inlined_call_operand.hbm [shape: f32[16,128], index: 1, kind: input, shape index: {}]
  %s2 = inlined_call_operand.vmem [shape: f32[1,128], index: 2, kind: input, shape index: {}]
  %s3 = inlined_call_operand.vmem [shape: f32[1,128], index: 3, kind: input, shape index: {}]
  %s4 = inlined_call_operand.hbm [shape: f32[16,128], index: 4, kind: output, shape index: {0}]
  %s5 = inlined_call_operand.hbm [shape: f32[16,128], index: 5, kind: output, shape index: {1}]
  %6 = xla_tuple %s4, %s5
  %s7 = sld [smem:[#allocation0]]
  $region65: #{tpu_custom_call.1} parent=0
    _
  %s9 = ssub.s32 1, %s7
  %s10 = scalar_select 0, %s9, %s7
  $region1: #{tpu_custom_call.1} parent=0
    #allocation2 [shape = 'u8[8192]{0}', space=vmem, size = 0x2000, scoped, tag = 'input window, operand 0']
    #allocation3 [shape = 's32[2]{0}', space=sflag, size = 0x8, scoped, tag = 'scoped memory for tpu_custom_call.1']
    #allocation4 [shape = 's32[2]{0}', space=sflag, size = 0x8, scoped, tag = 'scoped memory for tpu_custom_call.1']
    #allocation5 [shape = 'u8[8192]{0}', space=vmem, size = 0x2000, scoped, tag = 'input window, operand 1']
    #allocation6 [shape = 's32[2]{0}', space=sflag, size = 0x8, scoped, tag = 'scoped memory for tpu_custom_call.1']
    #allocation7 [shape = 'u8[8192]{0}', space=vmem, size = 0x2000, scoped, tag = 'output window, operand 0']
    #allocation8 [shape = 'u8[8192]{0}', space=vmem, size = 0x2000, scoped, tag = 'output window, operand 1']
    #allocation9 [shape = 's32[2]{0}', space=sflag, size = 0x8, scoped, tag = 'scoped memory for tpu_custom_call.1']
    %11 = vsyncpa [#allocation3], 0
    %s12 = scalar_lea.sflag [#allocation3], 1
    %13 = vsyncpa %s12, 0
    %14 = vsyncpa [#allocation6], 0
    %s15 = scalar_lea.sflag [#allocation6], 1
    %16 = vsyncpa %s15, 0
    %17 = vsyncpa [#allocation4], 0
    %s18 = scalar_lea.sflag [#allocation4], 1
    %19 = vsyncpa %s18, 0
    %20 = vsyncpa [#allocation9], 0
    %s21 = scalar_lea.sflag [#allocation9], 1
    %22 = vsyncpa %s21, 0
    loop: start=0, step=1, limit=4
    $region2: #{tpu_custom_call.1} parent=1 // loop_pre_header
      _
    $region3: #{tpu_custom_call.1} parent=1 // loop_header
      %s24 = sphi 0, %s28
      %p25 = scmp.ge.s32.totalorder %s24, 4
      %s34 = sphi 0, %s36
      %s37 = sphi 0, %s34
      %s38 = sphi 0, %s37
      %s54 = sphi 0, %s38
      %s60 = sphi 0, %s62
      %s63 = sphi 0, %s60
      %s64 = sphi 0, %s63
      %s80 = sphi 0, %s64
      %s84 = sphi 0, %s84
      %s86 = sphi 0, %s84
      %s87 = sphi 0, %s86
      %s101 = sphi 0, %s87
      %s105 = sphi 0, %s105
      %s107 = sphi 0, %s105
      %s108 = sphi 0, %s107
      %s122 = sphi 0, %s108
      %s128 = sphi 0, %s130
      %s131 = sphi 0, %s128
      %s132 = sphi 0, %s131
      %s148 = sphi 0, %s132
      %s154 = sphi 0, %s156
      %s157 = sphi 0, %s154
      %s158 = sphi 0, %s157
      %s174 = sphi 0, %s158
    $region4: #{tpu_custom_call.1} parent=1 // loop_header_branch
      %27 = sbr.rel (%p25) target = $region8
    $region5: #{tpu_custom_call.1} parent=1 // loop_body
      %s29 = ssub.s32 %s24, 1
      %s30 = ssub.s32 %s24, 2
      %s31 = sadd.s32 %s24, 1
      %s32 = ssub.s32 %s24, %s31
      %p33 = scmp.eq.s32.totalorder %s32, 0
      %s35 = sadd.s32 %s34, 1
      %s36 = scalar_select %p33, %s34, %s35
      %p39 = pneg %p33
      %p40 = scmp.eq.s32.totalorder %s24, 1
      %p41 = por %p39, %p40
      %p42 = scmp.ne.s32.totalorder %s34, %s37
      %p43 = scmp.eq.s32.totalorder %s24, 0
      %p44 = por %p42, %p43
      %p45 = scmp.ne.s32.totalorder %s34, %s37
      %p46 = scmp.eq.s32.totalorder %s29, 1
      %p47 = por %p45, %p46
      %p48 = scmp.ne.s32.totalorder %s37, %s38
      %p49 = scmp.eq.s32.totalorder %s29, 0
      %p50 = por %p48, %p49
      %p51 = scmp.ne.s32.totalorder %s37, %s38
      %p52 = scmp.eq.s32.totalorder %s30, 1
      %p53 = por %p51, %p52
      %p55 = scmp.ne.s32.totalorder %s38, %s54
      %p56 = scmp.eq.s32.totalorder %s30, 0
      %p57 = por %p55, %p56
      %s58 = ssub.s32 %s24, %s31
      %p59 = scmp.eq.s32.totalorder %s58, 0
      %s61 = sadd.s32 %s60, 1
      %s62 = scalar_select %p59, %s60, %s61
      %p65 = pneg %p59
      %p66 = scmp.eq.s32.totalorder %s24, 1
      %p67 = por %p65, %p66
      %p68 = scmp.ne.s32.totalorder %s60, %s63
      %p69 = scmp.eq.s32.totalorder %s24, 0
      %p70 = por %p68, %p69
      %p71 = scmp.ne.s32.totalorder %s60, %s63
      %p72 = scmp.eq.s32.totalorder %s29, 1
      %p73 = por %p71, %p72
      %p74 = scmp.ne.s32.totalorder %s63, %s64
      %p75 = scmp.eq.s32.totalorder %s29, 0
      %p76 = por %p74, %p75
      %p77 = scmp.ne.s32.totalorder %s63, %s64
      %p78 = scmp.eq.s32.totalorder %s30, 1
      %p79 = por %p77, %p78
      %p81 = scmp.ne.s32.totalorder %s64, %s80
      %p82 = scmp.eq.s32.totalorder %s30, 0
      %p83 = por %p81, %p82
      %s85 = sadd.s32 %s84, 1
      %p88 = scmp.eq.s32.totalorder %s24, 1
      %p89 = scmp.ne.s32.totalorder %s84, %s86
      %p90 = scmp.eq.s32.totalorder %s24, 0
      %p91 = por %p89, %p90
      %p92 = scmp.ne.s32.totalorder %s84, %s86
      %p93 = scmp.eq.s32.totalorder %s29, 1
      %p94 = por %p92, %p93
      %p95 = scmp.ne.s32.totalorder %s86, %s87
      %p96 = scmp.eq.s32.totalorder %s29, 0
      %p97 = por %p95, %p96
      %p98 = scmp.ne.s32.totalorder %s86, %s87
      %p99 = scmp.eq.s32.totalorder %s30, 1
      %p100 = por %p98, %p99
      %p102 = scmp.ne.s32.totalorder %s87, %s101
      %p103 = scmp.eq.s32.totalorder %s30, 0
      %p104 = por %p102, %p103
      %s106 = sadd.s32 %s105, 1
      %p109 = scmp.eq.s32.totalorder %s24, 1
      %p110 = scmp.ne.s32.totalorder %s105, %s107
      %p111 = scmp.eq.s32.totalorder %s24, 0
      %p112 = por %p110, %p111
      %p113 = scmp.ne.s32.totalorder %s105, %s107
      %p114 = scmp.eq.s32.totalorder %s29, 1
      %p115 = por %p113, %p114
      %p116 = scmp.ne.s32.totalorder %s107, %s108
      %p117 = scmp.eq.s32.totalorder %s29, 0
      %p118 = por %p116, %p117
      %p119 = scmp.ne.s32.totalorder %s107, %s108
      %p120 = scmp.eq.s32.totalorder %s30, 1
      %p121 = por %p119, %p120
      %p123 = scmp.ne.s32.totalorder %s108, %s122
      %p124 = scmp.eq.s32.totalorder %s30, 0
      %p125 = por %p123, %p124
      %s126 = ssub.s32 %s24, %s31
      %p127 = scmp.eq.s32.totalorder %s126, 0
      %s129 = sadd.s32 %s128, 1
      %s130 = scalar_select %p127, %s128, %s129
      %p133 = pneg %p127
      %p134 = scmp.eq.s32.totalorder %s24, 1
      %p135 = por %p133, %p134
      %p136 = scmp.ne.s32.totalorder %s128, %s131
      %p137 = scmp.eq.s32.totalorder %s24, 0
      %p138 = por %p136, %p137
      %p139 = scmp.ne.s32.totalorder %s128, %s131
      %p140 = scmp.eq.s32.totalorder %s29, 1
      %p141 = por %p139, %p140
      %p142 = scmp.ne.s32.totalorder %s131, %s132
      %p143 = scmp.eq.s32.totalorder %s29, 0
      %p144 = por %p142, %p143
      %p145 = scmp.ne.s32.totalorder %s131, %s132
      %p146 = scmp.eq.s32.totalorder %s30, 1
      %p147 = por %p145, %p146
      %p149 = scmp.ne.s32.totalorder %s132, %s148
      %p150 = scmp.eq.s32.totalorder %s30, 0
      %p151 = por %p149, %p150
      %s152 = ssub.s32 %s24, %s31
      %p153 = scmp.eq.s32.totalorder %s152, 0
      %s155 = sadd.s32 %s154, 1
      %s156 = scalar_select %p153, %s154, %s155
      %p159 = pneg %p153
      %p160 = scmp.eq.s32.totalorder %s24, 1
      %p161 = por %p159, %p160
      %p162 = scmp.ne.s32.totalorder %s154, %s157
      %p163 = scmp.eq.s32.totalorder %s24, 0
      %p164 = por %p162, %p163
      %p165 = scmp.ne.s32.totalorder %s154, %s157
      %p166 = scmp.eq.s32.totalorder %s29, 1
      %p167 = por %p165, %p166
      %p168 = scmp.ne.s32.totalorder %s157, %s158
      %p169 = scmp.eq.s32.totalorder %s29, 0
      %p170 = por %p168, %p169
      %p171 = scmp.ne.s32.totalorder %s157, %s158
      %p172 = scmp.eq.s32.totalorder %s30, 1
      %p173 = por %p171, %p172
      %p175 = scmp.ne.s32.totalorder %s158, %s174
      %p176 = scmp.eq.s32.totalorder %s30, 0
      %p177 = por %p175, %p176
      %p178 = scmp.le.s32.totalorder 1, %s24
      %p179 = scmp.lt.s32.totalorder %s24, 3
      %p180 = pnand %p178, %p179
      %p181 = pneg %p180
      // Predicated region
      $region9: #{tpu_custom_call.1} parent=5 // pred_check
        _
      $region10: #{tpu_custom_call.1} parent=5 // pred_check_branch
        %183 = sbr.rel (%p180) target = $region12
      $region11: #{tpu_custom_call.1} parent=5 // pred_region
        %s184 = ssub.s32 %s24, 1
        // Predicated region
        $region13: #{tpu_custom_call.1} parent=11 // pred_check
          %p185 = pneg %p97
        $region14: #{tpu_custom_call.1} parent=11 // pred_check_branch
          %187 = sbr.rel (%p185) target = $region16
        $region15: #{tpu_custom_call.1} parent=11 // pred_region
          _
        $region16: #{tpu_custom_call.1} parent=11 // pred_fallthru
          _
        // Predicated region
        $region17: #{tpu_custom_call.1} parent=11 // pred_check
          %p188 = pneg %p118
        $region18: #{tpu_custom_call.1} parent=11 // pred_check_branch
          %190 = sbr.rel (%p188) target = $region20
        $region19: #{tpu_custom_call.1} parent=11 // pred_region
          _
        $region20: #{tpu_custom_call.1} parent=11 // pred_fallthru
          _
      $region12: #{tpu_custom_call.1} parent=5 // pred_fallthru
        _
      %p191 = scmp.lt.s32.totalorder %s24, 2
      // Predicated region
      $region21: #{tpu_custom_call.1} parent=5 // pred_check
        %p192 = pneg %p191
      $region22: #{tpu_custom_call.1} parent=5 // pred_check_branch
        %194 = sbr.rel (%p192) target = $region24
      $region23: #{tpu_custom_call.1} parent=5 // pred_region
        // Predicated region
        $region25: #{tpu_custom_call.1} parent=23 // pred_check
          %p195 = pneg %p44
        $region26: #{tpu_custom_call.1} parent=23 // pred_check_branch
          %197 = sbr.rel (%p195) target = $region28
        $region27: #{tpu_custom_call.1} parent=23 // pred_region
          %s198 = sand.u32 %s34, 1
          %s199 = scalar_lea.sflag [#allocation3], %s198
          %s200 = sand.u32 %s34, 1
          %s201 = smul.addr %s200, 8
          %s202 = scalar_lea.vmem [#allocation2], %s201
          %s204 = ssub.s32 128, 128
          %205 = vsyncadd %s199, %s204
          %s206 = smul.addr %s24, 128
          %s207 = scalar_lea.hbm %s0, %s206
          %s209 = sshll.u32 %s202, 4
          %s210 = int_to_ptr.vmem [resolvable:$true] %s209
          %212 = dma.hbm_to_vmem [thread:$0]  %s207, 128, %s210, %s199
        $region28: #{tpu_custom_call.1} parent=23 // pred_fallthru
          _
        // Predicated region
        $region29: #{tpu_custom_call.1} parent=23 // pred_check
          %p213 = pneg %p70
        $region30: #{tpu_custom_call.1} parent=23 // pred_check_branch
          %215 = sbr.rel (%p213) target = $region32
        $region31: #{tpu_custom_call.1} parent=23 // pred_region
          %s216 = sand.u32 %s60, 1
          %s217 = scalar_lea.sflag [#allocation6], %s216
          %s218 = sand.u32 %s60, 1
          %s219 = smul.addr %s218, 8
          %s220 = scalar_lea.vmem [#allocation5], %s219
          %s222 = ssub.s32 128, 128
          %223 = vsyncadd %s217, %s222
          %s224 = smul.addr %s24, 128
          %s225 = scalar_lea.hbm %s1, %s224
          %s227 = sshll.u32 %s220, 4
          %s228 = int_to_ptr.vmem [resolvable:$true] %s227
          %230 = dma.hbm_to_vmem [thread:$0]  %s225, 128, %s228, %s217
        $region32: #{tpu_custom_call.1} parent=23 // pred_fallthru
          _
      $region24: #{tpu_custom_call.1} parent=5 // pred_fallthru
        _
      %p231 = scmp.le.s32.totalorder 1, %s24
      %p232 = scmp.lt.s32.totalorder %s24, 3
      %p233 = pnand %p231, %p232
      %p234 = pneg %p233
      // Predicated region
      $region33: #{tpu_custom_call.1} parent=5 // pred_check
        _
      $region34: #{tpu_custom_call.1} parent=5 // pred_check_branch
        %236 = sbr.rel (%p233) target = $region36
      $region35: #{tpu_custom_call.1} parent=5 // pred_region
        %s237 = ssub.s32 %s24, 1
        %s238 = sand.u32 %s37, 1
        %s239 = scalar_lea.sflag [#allocation3], %s238
        %s240 = sand.u32 %s37, 1
        %s241 = smul.addr %s240, 8
        %s242 = scalar_lea.vmem [#allocation2], %s241
        // Predicated region
        $region37: #{tpu_custom_call.1} parent=35 // pred_check
          %p243 = pneg %p50
        $region38: #{tpu_custom_call.1} parent=35 // pred_check_branch
          %245 = sbr.rel (%p243) target = $region40
        $region39: #{tpu_custom_call.1} parent=35 // pred_region
          %246 = dma.done %s239, 128
        $region40: #{tpu_custom_call.1} parent=35 // pred_fallthru
          _
        %s247 = sand.u32 %s63, 1
        %s248 = scalar_lea.sflag [#allocation6], %s247
        %s249 = sand.u32 %s63, 1
        %s250 = smul.addr %s249, 8
        %s251 = scalar_lea.vmem [#allocation5], %s250
        // Predicated region
        $region41: #{tpu_custom_call.1} parent=35 // pred_check
          %p252 = pneg %p76
        $region42: #{tpu_custom_call.1} parent=35 // pred_check_branch
          %254 = sbr.rel (%p252) target = $region44
        $region43: #{tpu_custom_call.1} parent=35 // pred_region
          %255 = dma.done %s248, 128
        $region44: #{tpu_custom_call.1} parent=35 // pred_fallthru
          _
        %s256 = sand.u32 %s37, 1
        %s257 = scalar_lea.sflag [#allocation3], %s256
        %s258 = sand.u32 %s37, 1
        %s259 = smul.addr %s258, 8
        %s260 = scalar_lea.vmem [#allocation2], %s259
        %p261 = pneg %p50
        %p262 = pneg %p47
        %s263 = sand.u32 %s63, 1
        %s264 = scalar_lea.sflag [#allocation6], %s263
        %s265 = sand.u32 %s63, 1
        %s266 = smul.addr %s265, 8
        %s267 = scalar_lea.vmem [#allocation5], %s266
        %p268 = pneg %p76
        %p269 = pneg %p73
        %p270 = pneg %p97
        %p271 = pneg %p94
        %p272 = pneg %p118
        %p273 = pneg %p115
        %p274 = pneg %p144
        %p275 = pneg %p141
        %s276 = sand.u32 %s131, 1
        %s277 = scalar_lea.sflag [#allocation4], %s276
        %s278 = sand.u32 %s131, 1
        %s279 = smul.addr %s278, 8
        %s280 = scalar_lea.vmem [#allocation7], %s279
        %p281 = pneg %p170
        %p282 = pneg %p167
        %s283 = sand.u32 %s157, 1
        %s284 = scalar_lea.sflag [#allocation9], %s283
        %s285 = sand.u32 %s157, 1
        %s286 = smul.addr %s285, 8
        %s287 = scalar_lea.vmem [#allocation8], %s286
        %v288 = vld [vmem:[%s2] sm:$0x1]
        %v289 = vld [vmem:[%s3] sm:$0x1]
        %v290 = vld [vmem:[%s242] sm:$0xff]
        %v291 = vld [vmem:[%s251] sm:$0xff]
        %v293 = vlaneseq
        %v294 = vshrl.u32 %v293, 7
        %v295 = vsub.s32 0, %v294
        %v296 = vrot.slane %v288, %v295
        %v298 = vmul.f32 %v290, %v296
        %v300 = vlaneseq
        %v301 = vshrl.u32 %v300, 7
        %v302 = vsub.s32 0, %v301
        %v303 = vrot.slane %v289, %v302
        %v305 = vmul.f32 %v291, %v303
        %v306 = vsub.f32 %v298, %v305
        %307 = vst [vmem:[%s280] sm:$0xff] %v306
        %v308 = vmul.f32 %v290, %v303
        %v309 = vmul.f32 %v291, %v296
        %v310 = vadd.f32 %v308, %v309
        %311 = vst [vmem:[%s287] sm:$0xff] %v310
        %s312 = sand.u32 %s131, 1
        %s313 = scalar_lea.sflag [#allocation4], %s312
        %s314 = sand.u32 %s131, 1
        %s315 = smul.addr %s314, 8
        %s316 = scalar_lea.vmem [#allocation7], %s315
        %s317 = sand.u32 %s157, 1
        %s318 = scalar_lea.sflag [#allocation9], %s317
        %s319 = sand.u32 %s157, 1
        %s320 = smul.addr %s319, 8
        %s321 = scalar_lea.vmem [#allocation8], %s320
        // Predicated region
        $region45: #{tpu_custom_call.1} parent=35 // pred_check
          %p322 = pneg %p141
        $region46: #{tpu_custom_call.1} parent=35 // pred_check_branch
          %324 = sbr.rel (%p322) target = $region48
        $region47: #{tpu_custom_call.1} parent=35 // pred_region
          %s326 = ssub.s32 128, 128
          %327 = vsyncadd %s313, %s326
          %s328 = smul.addr %s29, 128
          %s329 = scalar_lea.hbm %s4, %s328
          %s331 = sshll.u32 %s316, 4
          %s332 = int_to_ptr.vmem [resolvable:$true] %s331
          %334 = dma.vmem_to_hbm [thread:$0]  %s332, 128, %s329, %s313
        $region48: #{tpu_custom_call.1} parent=35 // pred_fallthru
          _
        // Predicated region
        $region49: #{tpu_custom_call.1} parent=35 // pred_check
          %p335 = pneg %p167
        $region50: #{tpu_custom_call.1} parent=35 // pred_check_branch
          %337 = sbr.rel (%p335) target = $region52
        $region51: #{tpu_custom_call.1} parent=35 // pred_region
          %s339 = ssub.s32 128, 128
          %340 = vsyncadd %s318, %s339
          %s341 = smul.addr %s29, 128
          %s342 = scalar_lea.hbm %s5, %s341
          %s344 = sshll.u32 %s321, 4
          %s345 = int_to_ptr.vmem [resolvable:$true] %s344
          %347 = dma.vmem_to_hbm [thread:$0]  %s345, 128, %s342, %s318
        $region52: #{tpu_custom_call.1} parent=35 // pred_fallthru
          _
      $region36: #{tpu_custom_call.1} parent=5 // pred_fallthru
        _
      %p348 = scmp.le.s32.totalorder 2, %s24
      // Predicated region
      $region53: #{tpu_custom_call.1} parent=5 // pred_check
        %p349 = pneg %p348
      $region54: #{tpu_custom_call.1} parent=5 // pred_check_branch
        %351 = sbr.rel (%p349) target = $region56
      $region55: #{tpu_custom_call.1} parent=5 // pred_region
        %s352 = ssub.s32 %s24, 2
        // Predicated region
        $region57: #{tpu_custom_call.1} parent=55 // pred_check
          %p353 = pneg %p147
        $region58: #{tpu_custom_call.1} parent=55 // pred_check_branch
          %355 = sbr.rel (%p353) target = $region60
        $region59: #{tpu_custom_call.1} parent=55 // pred_region
          %s356 = sand.u32 %s132, 1
          %s357 = scalar_lea.sflag [#allocation4], %s356
          %s358 = sand.u32 %s132, 1
          %s359 = smul.addr %s358, 8
          %s360 = scalar_lea.vmem [#allocation7], %s359
          %361 = dma.done %s357, 128
        $region60: #{tpu_custom_call.1} parent=55 // pred_fallthru
          _
        // Predicated region
        $region61: #{tpu_custom_call.1} parent=55 // pred_check
          %p362 = pneg %p173
        $region62: #{tpu_custom_call.1} parent=55 // pred_check_branch
          %364 = sbr.rel (%p362) target = $region64
        $region63: #{tpu_custom_call.1} parent=55 // pred_region
          %s365 = sand.u32 %s158, 1
          %s366 = scalar_lea.sflag [#allocation9], %s365
          %s367 = sand.u32 %s158, 1
          %s368 = smul.addr %s367, 8
          %s369 = scalar_lea.vmem [#allocation8], %s368
          %370 = dma.done %s366, 128
        $region64: #{tpu_custom_call.1} parent=55 // pred_fallthru
          _
      $region56: #{tpu_custom_call.1} parent=5 // pred_fallthru
        _
    $region6: #{tpu_custom_call.1} parent=1 // loop_footer
      %s28 = sadd.s32 1, %s24
    $region7: #{tpu_custom_call.1} parent=1 // loop_footer_branch
      %23 = sbr.rel target = $region3
    $region8: #{tpu_custom_call.1} parent=1 // loop_exit
      _
    %371 = vsyncpa [#allocation3], 1
    %s372 = scalar_lea.sflag [#allocation3], 1
    %373 = vsyncpa %s372, 1
    %374 = vsyncpa [#allocation6], 1
    %s375 = scalar_lea.sflag [#allocation6], 1
    %376 = vsyncpa %s375, 1
    %377 = vsyncpa [#allocation4], 1
    %s378 = scalar_lea.sflag [#allocation4], 1
    %379 = vsyncpa %s378, 1
    %380 = vsyncpa [#allocation9], 1
    %s381 = scalar_lea.sflag [#allocation9], 1
    %382 = vsyncpa %s381, 1

</llo_original>
